<compile_context>
chip_gen: v7x
topology: tpu7x:2x2x1
jax: 0.10.0
libtpu: 0.0.40
codegen_flags: <defaults>
</compile_context>

<pallas_src>
import functools

import jax
import jax.numpy as jnp
import numpy as np
from jax import lax
from jax.experimental import pallas as pl
from jax.experimental.pallas import tpu as pltpu


def _largest_tile(total, cap):
    """Largest multiple-of-8 divisor of `total` that is <= min(cap, 512)."""
    cap = min(int(cap), 512, int(total))
    cap -= cap % 8
    for c in range(cap, 7, -8):
        if total % c == 0:
            return c
    return None


# ---------------------------------------------------------------------------
# Kernel 1: per-row-tile mean over the K decodings + L2 normalization.
# ---------------------------------------------------------------------------
def _feats_kernel(*refs, inv_k):
    dec_refs, out_ref = refs[:-1], refs[-1]
    acc = dec_refs[0][...].astype(jnp.float32)        # upcast once, in-kernel
    for r in dec_refs[1:]:
        acc = acc + r[...].astype(jnp.float32)
    means = acc * jnp.float32(inv_k)                  # (TF, D)
    sq = jnp.sum(means * means, axis=1, keepdims=True)
    # torch.nn.functional.normalize: x / max(||x||_2, 1e-12).  The divide is
    # done on the (TF, 1) column only; the (TF, D)-wide op is one multiply.
    inv_norm = 1.0 / jnp.maximum(jnp.sqrt(sq), jnp.float32(1e-12))
    out_ref[...] = (means * inv_norm).astype(out_ref.dtype)


# ---------------------------------------------------------------------------
# Kernel 2: flash-style logsumexp over streamed column tiles, minus positive,
# reduced in-kernel to one partial sum per row tile.
#   grid = (row_tiles, col_tiles); col axis is the (arbitrary) reduction axis.
# ---------------------------------------------------------------------------
def _loss_kernel(*refs, inv_t, half_n, tm, tc, roll_partner):
    if roll_partner:
        q_ref, k_ref, out_ref, m_sc, l_sc = refs
        p_ref = None
    else:
        q_ref, k_ref, p_ref, out_ref, m_sc, l_sc = refs

    i = pl.program_id(0)
    j = pl.program_id(1)

    @pl.when(j == 0)
    def _init():
        m_sc[...] = jnp.full(m_sc.shape, -1e30, jnp.float32)
        l_sc[...] = jnp.zeros(l_sc.shape, jnp.float32)

    q = q_ref[...]                                    # (TM, D)  f32 or bf16
    kt = k_ref[...]                                   # (TC, D)
    # Contract the shared last dim directly (no transpose); bf16 inputs take
    # the fast MXU path, accumulation stays f32.
    s = lax.dot_general(q, kt, (((1,), (1,)), ((), ())),
                        preferred_element_type=jnp.float32)
    s = s * jnp.float32(inv_t)                        # (TM, TC) logits

    def _online_update(s_blk):
        m_prev = m_sc[...]
        m_new = jnp.maximum(m_prev, jnp.max(s_blk, axis=1, keepdims=True))
        alpha = jnp.exp(m_prev - m_new)
        l_sc[...] = alpha * l_sc[...] + jnp.sum(jnp.exp(s_blk - m_new),
                                                axis=1, keepdims=True)
        m_sc[...] = m_new

    # Only tiles intersecting the global diagonal pay for the mask.
    row0 = i * tm
    col0 = j * tc
    has_diag = jnp.logical_and(row0 < col0 + tc, col0 < row0 + tm)

    @pl.when(has_diag)
    def _masked():
        row = row0 + lax.broadcasted_iota(jnp.int32, (tm, tc), 0)
        col = col0 + lax.broadcasted_iota(jnp.int32, (tm, tc), 1)
        _online_update(jnp.where(row == col, jnp.float32(-1e30), s))

    @pl.when(jnp.logical_not(has_diag))
    def _unmasked():
        _online_update(s)

    @pl.when(j == pl.num_programs(1) - 1)
    def _finalize():
        qf = q.astype(jnp.float32)
        if roll_partner:
            # Single row tile (tm == N): partner of row r is (r + N/2) % N.
            pf = pltpu.roll(qf, shift=half_n, axis=0)
        else:
            pf = p_ref[...].astype(jnp.float32)       # block-shifted by index_map
        pos = jnp.sum(qf * pf, axis=1, keepdims=True) * jnp.float32(inv_t)
        lse = m_sc[...] + jnp.log(l_sc[...])
        # One scalar per row tile -> no lane-sparse (N, 1) writeback.
        tile_sum = jnp.sum(lse - pos, axis=0, keepdims=True)   # (1, 1)
        out_ref[...] = tile_sum.reshape(1, 1, 1)


# ---------------------------------------------------------------------------
# Wrapper
# ---------------------------------------------------------------------------
def simclr_resemblance_loss(decodings, temperature, *, use_bf16=True):
    """decodings: list of (N, D) arrays with N = 2 * batch_size.

    use_bf16=True (default fast path): features stored in bf16, bf16 fed to the
    MXU, f32 accumulation / f32 elementwise math everywhere.
    use_bf16=False: fully f32 (matches the f32 reference to ~1e-5).
    """
    decodings = list(decodings)
    k = len(decodings)
    n, d = decodings[0].shape
    assert n % 2 == 0, "expected two views per sample (even row count)"
    b = n // 2
    inv_t = 1.0 / float(temperature)

    # Lane-align the feature dim; zero columns change neither the mean, the
    # L2 norm, nor any dot product.
    d_pad = ((d + 127) // 128) * 128
    if d_pad != d:
        decodings = [jnp.pad(x, ((0, 0), (0, d_pad - d))) for x in decodings]

    in_bytes = jnp.dtype(decodings[0].dtype).itemsize
    feat_dtype = jnp.bfloat16 if use_bf16 else jnp.float32
    feat_bytes = jnp.dtype(feat_dtype).itemsize

    # ---- kernel 1: mean over decodings + L2 normalize ----------------------
    # per-row VMEM: double-buffered K inputs + double-buffered output + f32 temps
    per_row_bytes = d_pad * (2 * k * in_bytes + 2 * feat_bytes + 8)
    tf = _largest_tile(n, max(8, (24 << 20) // per_row_bytes)) or n
    feats_est = tf * per_row_bytes + (1 << 20)
    feats_vmem = int(min(48 << 20, max(32 << 20, feats_est)))

    feats = pl.pallas_call(
        functools.partial(_feats_kernel, inv_k=1.0 / k),
        out_shape=jax.ShapeDtypeStruct((n, d_pad), feat_dtype),
        grid_spec=pltpu.PrefetchScalarGridSpec(
            num_scalar_prefetch=0,
            grid=(n // tf,),
            in_specs=[pl.BlockSpec((tf, d_pad), lambda i: (i, 0))
                      for _ in range(k)],
            out_specs=pl.BlockSpec((tf, d_pad), lambda i: (i, 0)),
        ),
        compiler_params=pltpu.CompilerParams(
            dimension_semantics=("parallel",),
            vmem_limit_bytes=feats_vmem),
    )(*decodings)

    # ---- kernel 2: row-tiled, column-streamed NT-Xent loss ------------------
    # D-aware tile caps keep double-buffered blocks well inside v7x's 64 MiB
    # VMEM while still allowing 512-wide tiles for small D.
    tile_cap = max(8, (6 << 20) // (2 * feat_bytes * d_pad))
    tm = _largest_tile(b, tile_cap)   # must divide B for block-shifted partner
    roll_partner = tm is None
    if roll_partner:
        # TODO(synk): pad N/B to a multiple of 8 (with masked pad rows) so tiny
        # or odd batches also get >=2 row tiles / megacore sharding; at the
        # sizes that hit this path the single-tile pltpu.roll fallback is cheap.
        tm = n
    tc = _largest_tile(n, tile_cap) or n
    num_row_tiles = n // tm
    num_col_tiles = n // tc

    q_spec = pl.BlockSpec((tm, d_pad), lambda i, j: (i, 0))   # resident query rows
    k_spec = pl.BlockSpec((tc, d_pad), lambda i, j: (j, 0))   # streamed columns
    if roll_partner:
        in_specs = [q_spec, k_spec]          # partner = roll(q); no third DMA
        operands = (feats, feats)
    else:
        shift_blk = b // tm
        p_spec = pl.BlockSpec(
            (tm, d_pad), lambda i, j: ((i + shift_blk) % num_row_tiles, 0))
        in_specs = [q_spec, k_spec, p_spec]
        operands = (feats, feats, feats)

    loss_est = (2 * feat_bytes * d_pad * (tm + tc + (0 if roll_partner else tm))
                + 12 * tm * tc + 16 * tm + (1 << 20))
    loss_vmem = int(min(48 << 20, max(32 << 20, loss_est)))

    partial_sums = pl.pallas_call(
        functools.partial(_loss_kernel, inv_t=inv_t, half_n=b, tm=tm, tc=tc,
                          roll_partner=roll_partner),
        out_shape=jax.ShapeDtypeStruct((num_row_tiles, 1, 1), jnp.float32),
        grid_spec=pltpu.PrefetchScalarGridSpec(
            num_scalar_prefetch=0,
            grid=(num_row_tiles, num_col_tiles),
            in_specs=in_specs,
            out_specs=pl.BlockSpec((1, 1, 1), lambda i, j: (i, 0, 0)),
            scratch_shapes=[pltpu.VMEM((tm, 1), jnp.float32),   # running max
                            pltpu.VMEM((tm, 1), jnp.float32)],  # running sum
        ),
        compiler_params=pltpu.CompilerParams(
            dimension_semantics=("parallel", "arbitrary"),
            vmem_limit_bytes=loss_vmem),
    )(*operands)

    # CrossEntropyLoss(..., reduction='mean')
    return jnp.sum(partial_sums) / n


# ---------------------------------------------------------------------------
# Pure-JAX reference mirroring the PyTorch forward exactly.
# ---------------------------------------------------------------------------
def _reference_loss(decodings, temperature):
    means = jnp.mean(jnp.stack(decodings).astype(jnp.float32), axis=0)
    n = means.shape[0]
    b = n // 2
    norm = jnp.sqrt(jnp.sum(means * means, axis=1, keepdims=True))
    feats = means / jnp.maximum(norm, 1e-12)
    sim = jnp.matmul(feats, feats.T, precision=lax.Precision.HIGHEST)
    logits = sim / temperature
    idx = jnp.arange(n)
    diag = idx[:, None] == idx[None, :]
    pos_mask = idx[:, None] == ((idx[None, :] + b) % n)
    masked = jnp.where(diag, -jnp.inf, logits)
    lse = jax.scipy.special.logsumexp(masked, axis=1)
    pos = jnp.sum(jnp.where(pos_mask, logits, 0.0), axis=1)
    return jnp.mean(lse - pos)


if __name__ == "__main__":
    key_small, key_big = jax.random.split(jax.random.PRNGKey(0))

    # --- small config (exercises the single-tile / pltpu.roll fallback) -----
    batch_size, feat_dim, n_dec, temperature = 4, 32, 3, 0.5
    keys = jax.random.split(key_small, n_dec)
    small = [jax.random.normal(kk, (2 * batch_size, feat_dim), jnp.float32)
             for kk in keys]
    ref_s = _reference_loss(small, temperature)

    loss_f32 = simclr_resemblance_loss(small, temperature, use_bf16=False)
    jax.block_until_ready(loss_f32)
    np.testing.assert_allclose(np.asarray(loss_f32), np.asarray(ref_s),
                               rtol=1e-5, atol=1e-5)

    loss_bf16 = simclr_resemblance_loss(small, temperature)   # default bf16 path
    jax.block_until_ready(loss_bf16)
    np.testing.assert_allclose(np.asarray(loss_bf16), np.asarray(ref_s),
                               rtol=3e-2, atol=3e-2)

    # --- larger config (multi row/col tiles, block-shifted partner, diagonal
    #     skip on off-diagonal tiles, padded D) ------------------------------
    batch_size2, feat_dim2, n_dec2, temperature2 = 640, 40, 2, 0.5
    keys2 = jax.random.split(key_big, n_dec2)
    big = [jax.random.normal(kk, (2 * batch_size2, feat_dim2), jnp.float32)
           for kk in keys2]
    ref_b = _reference_loss(big, temperature2)

    loss_b_f32 = simclr_resemblance_loss(big, temperature2, use_bf16=False)
    jax.block_until_ready(loss_b_f32)
    np.testing.assert_allclose(np.asarray(loss_b_f32), np.asarray(ref_b),
                               rtol=1e-5, atol=1e-5)

    loss_b_bf16 = simclr_resemblance_loss(big, temperature2)
    jax.block_until_ready(loss_b_bf16)
    np.testing.assert_allclose(np.asarray(loss_b_bf16), np.asarray(ref_b),
                               rtol=3e-2, atol=3e-2)

    print("KERNEL_OK")
</pallas_src>

<mosaic_0001>
module attributes {stable_mosaic.version = 11 : i64} {
  func.func @_feats_kernel(%arg0: i32, %arg1: memref<8x128xf32, #tpu.memory_space<vmem>>, %arg2: memref<8x128xf32, #tpu.memory_space<vmem>>, %arg3: memref<8x128xf32, #tpu.memory_space<vmem>>, %arg4: memref<8x128xf32, #tpu.memory_space<vmem>>) attributes {dimension_semantics = [#tpu.dimension_semantics<parallel>], iteration_bounds = array<i64: 1>, scalar_prefetch = 0 : i64, scratch_operands = 0 : i64, tpu.core_type = #tpu.core_type<tc>, window_params = [{transform_indices = @transform_0, window_bounds = array<i64: 8, 128>}, {transform_indices = @transform_1, window_bounds = array<i64: 8, 128>}, {transform_indices = @transform_2, window_bounds = array<i64: 8, 128>}, {transform_indices = @transform_3, window_bounds = array<i64: 8, 128>}]} {
    %c0 = arith.constant 0 : index
    %c0_0 = arith.constant 0 : index
    %0 = vector.load %arg1[%c0, %c0_0] : memref<8x128xf32, #tpu.memory_space<vmem>>, vector<8x128xf32>
    %c0_1 = arith.constant 0 : index
    %c0_2 = arith.constant 0 : index
    %1 = vector.load %arg2[%c0_1, %c0_2] : memref<8x128xf32, #tpu.memory_space<vmem>>, vector<8x128xf32>
    %2 = arith.addf %0, %1 : vector<8x128xf32>
    %c0_3 = arith.constant 0 : index
    %c0_4 = arith.constant 0 : index
    %3 = vector.load %arg3[%c0_3, %c0_4] : memref<8x128xf32, #tpu.memory_space<vmem>>, vector<8x128xf32>
    %4 = arith.addf %2, %3 : vector<8x128xf32>
    %cst = arith.constant 0.333333343 : f32
    %5 = vector.broadcast %cst : f32 to vector<8x128xf32>
    %6 = arith.mulf %4, %5 : vector<8x128xf32>
    %7 = arith.mulf %6, %6 : vector<8x128xf32>
    %cst_5 = arith.constant dense<0.000000e+00> : vector<8xf32>
    %8 = vector.multi_reduction <add>, %7, %cst_5 [1] : vector<8x128xf32> to vector<8xf32>
    %9 = vector.shape_cast %8 : vector<8xf32> to vector<8x1xf32>
    %10 = math.sqrt %9 : vector<8x1xf32>
    %cst_6 = arith.constant 9.99999996E-13 : f32
    %11 = vector.broadcast %cst_6 : f32 to vector<8x1xf32>
    %12 = arith.maximumf %10, %11 : vector<8x1xf32>
    %cst_7 = arith.constant 1.000000e+00 : f32
    %13 = vector.broadcast %cst_7 : f32 to vector<8x1xf32>
    %14 = arith.divf %13, %12 : vector<8x1xf32>
    %15 = vector.broadcast %14 : vector<8x1xf32> to vector<8x128xf32>
    %16 = arith.mulf %6, %15 : vector<8x128xf32>
    %c0_8 = arith.constant 0 : index
    %c0_9 = arith.constant 0 : index
    %17 = vector.load %arg4[%c0_8, %c0_9] : memref<8x128xf32, #tpu.memory_space<vmem>>, vector<8x128xf32>
    tpu.vector_store %arg4[%c0_8, %c0_9], %16 {strides = array<i32>} : memref<8x128xf32, #tpu.memory_space<vmem>>, vector<8x128xf32>,
    return
  }
  func.func @transform_0(%arg0: i32) -> (i32, i32) {
    %c0_i32 = arith.constant 0 : i32
    %c0_i32_0 = arith.constant 0 : i32
    return %arg0, %c0_i32 : i32, i32
  }
  func.func @transform_1(%arg0: i32) -> (i32, i32) {
    %c0_i32 = arith.constant 0 : i32
    %c0_i32_0 = arith.constant 0 : i32
    return %arg0, %c0_i32 : i32, i32
  }
  func.func @transform_2(%arg0: i32) -> (i32, i32) {
    %c0_i32 = arith.constant 0 : i32
    %c0_i32_0 = arith.constant 0 : i32
    return %arg0, %c0_i32 : i32, i32
  }
  func.func @transform_3(%arg0: i32) -> (i32, i32) {
    %c0_i32 = arith.constant 0 : i32
    %c0_i32_0 = arith.constant 0 : i32
    return %arg0, %c0_i32 : i32, i32
  }
}

</mosaic_0001>

<llo_original>
// kernel: tpu_custom_call.1
$region0: #{tpu_custom_call.1}
  #allocation0 [shape = 'u32[]', space=smem, size = 0x4, offset = 0x4, fixed_abs, tag = 'smem constant byte address 0x4 - core index']
  #allocation1 [shape = 'u32[144,128]{1,0:T(1,128)}', space=vmem, size = 0x12000, scoped, tag = 'internal scratch']
  %s0 = inlined_call_operand.hbm [shape: f32[8,128], index: 0, kind: input, shape index: {}]
  %s1 = inlined_call_operand.hbm [shape: f32[8,128], index: 1, kind: input, shape index: {}]
  %s2 = inlined_call_operand.hbm [shape: f32[8,128], index: 2, kind: input, shape index: {}]
  %s3 = inlined_call_operand.hbm [shape: f32[8,128], index: 3, kind: output, shape index: {}]
  %s4 = sld [smem:[#allocation0]]
  $region34: #{tpu_custom_call.1} parent=0
    _
  %s6 = ssub.s32 1, %s4
  %s7 = scalar_select 0, %s6, %s4
  $region1: #{tpu_custom_call.1} parent=0
    #allocation2 [shape = 'u8[4096]{0}', space=vmem, size = 0x1000, scoped, tag = 'input window, operand 0, single buffered']
    #allocation3 [shape = 's32[1]{0}', space=sflag, size = 0x4, scoped, tag = 'scoped memory for tpu_custom_call.1']
    #allocation4 [shape = 's32[1]{0}', space=sflag, size = 0x4, scoped, tag = 'scoped memory for tpu_custom_call.1']
    #allocation5 [shape = 'u8[4096]{0}', space=vmem, size = 0x1000, scoped, tag = 'input window, operand 1, single buffered']
    #allocation6 [shape = 's32[1]{0}', space=sflag, size = 0x4, scoped, tag = 'scoped memory for tpu_custom_call.1']
    #allocation7 [shape = 'u8[4096]{0}', space=vmem, size = 0x1000, scoped, tag = 'input window, operand 2, single buffered']
    #allocation8 [shape = 'u8[4096]{0}', space=vmem, size = 0x1000, scoped, tag = 'output window, operand 0, single buffered']
    %8 = vsyncpa [#allocation3], 0
    %9 = vsyncpa [#allocation6], 0
    %10 = vsyncpa [#allocation4], 0
    // Predicated region
    $region2: #{tpu_custom_call.1} parent=1 // pred_check
      _
    $region3: #{tpu_custom_call.1} parent=1 // pred_check_branch
      %12 = sbr.rel (0) target = $region5
    $region4: #{tpu_custom_call.1} parent=1 // pred_region
      %s14 = ssub.s32 128, 128
      %15 = vsyncadd [#allocation3], %s14
      %s17 = sshll.u32 [#allocation2], 4
      %s18 = int_to_ptr.vmem [resolvable:$true] %s17
      %20 = dma.hbm_to_vmem [thread:$0]  %s0, 128, %s18, [#allocation3]
    $region5: #{tpu_custom_call.1} parent=1 // pred_fallthru
      _
    // Predicated region
    $region6: #{tpu_custom_call.1} parent=1 // pred_check
      _
    $region7: #{tpu_custom_call.1} parent=1 // pred_check_branch
      %22 = sbr.rel (0) target = $region9
    $region8: #{tpu_custom_call.1} parent=1 // pred_region
      %s24 = ssub.s32 128, 128
      %25 = vsyncadd [#allocation6], %s24
      %s27 = sshll.u32 [#allocation5], 4
      %s28 = int_to_ptr.vmem [resolvable:$true] %s27
      %30 = dma.hbm_to_vmem [thread:$0]  %s1, 128, %s28, [#allocation6]
    $region9: #{tpu_custom_call.1} parent=1 // pred_fallthru
      _
    // Predicated region
    $region10: #{tpu_custom_call.1} parent=1 // pred_check
      _
    $region11: #{tpu_custom_call.1} parent=1 // pred_check_branch
      %32 = sbr.rel (0) target = $region13
    $region12: #{tpu_custom_call.1} parent=1 // pred_region
      %s34 = ssub.s32 128, 128
      %35 = vsyncadd [#allocation6], %s34
      %s37 = sshll.u32 [#allocation7], 4
      %s38 = int_to_ptr.vmem [resolvable:$true] %s37
      %40 = dma.hbm_to_vmem [thread:$0]  %s2, 128, %s38, [#allocation6]
    $region13: #{tpu_custom_call.1} parent=1 // pred_fallthru
      _
    // Predicated region
    $region14: #{tpu_custom_call.1} parent=1 // pred_check
      _
    $region15: #{tpu_custom_call.1} parent=1 // pred_check_branch
      %42 = sbr.rel (0) target = $region17
    $region16: #{tpu_custom_call.1} parent=1 // pred_region
      %43 = dma.done [#allocation3], 128
    $region17: #{tpu_custom_call.1} parent=1 // pred_fallthru
      _
    // Predicated region
    $region18: #{tpu_custom_call.1} parent=1 // pred_check
      _
    $region19: #{tpu_custom_call.1} parent=1 // pred_check_branch
      %45 = sbr.rel (0) target = $region21
    $region20: #{tpu_custom_call.1} parent=1 // pred_region
      %46 = dma.done [#allocation6], 128
    $region21: #{tpu_custom_call.1} parent=1 // pred_fallthru
      _
    // Predicated region
    $region22: #{tpu_custom_call.1} parent=1 // pred_check
      _
    $region23: #{tpu_custom_call.1} parent=1 // pred_check_branch
      %48 = sbr.rel (0) target = $region25
    $region24: #{tpu_custom_call.1} parent=1 // pred_region
      %49 = dma.done [#allocation6], 128
    $region25: #{tpu_custom_call.1} parent=1 // pred_fallthru
      _
    %v50 = vld [vmem:[#allocation2] sm:$0xff]
    %v51 = vld [vmem:[#allocation5] sm:$0xff]
    %v52 = vadd.f32 %v50, %v51
    %v53 = vld [vmem:[#allocation7] sm:$0xff]
    %v54 = vadd.f32 %v52, %v53
    %v55 = vmul.f32 %v54, 0.33333334
    %v56 = vmul.f32 %v55, %v55
    %57 = vadd.xlane.f32.xlu0 %v56
    %v58 = vpop.xlane.xlu0 %57
    %v59 = vrsqrt.pop %v58
    %v60 = vmul.f32 %v58, %v59
    %vm61 = vcmp.eq.f32.partialorder %v58, inf
    %v62 = vsel %vm61, %v58, %v60
    %vm63 = vcmp.eq.f32.partialorder %v58, 0.0
    %v64 = vand.u32 %v58, 2147483648
    %v65 = vsel %vm63, %v64, %v62
    %v66 = vmax.f32 %v65, 1e-12
    %v67 = vrcp.pop %v66
    %v68 = vmul.f32 1.0, %v67
    %v69 = vmul.f32 %v55, %v68
    %70 = vst [vmem:[#allocation8] sm:$0xff] %v69
    // Predicated region
    $region26: #{tpu_custom_call.1} parent=1 // pred_check
      _
    $region27: #{tpu_custom_call.1} parent=1 // pred_check_branch
      %72 = sbr.rel (0) target = $region29
    $region28: #{tpu_custom_call.1} parent=1 // pred_region
      %s74 = ssub.s32 128, 128
      %75 = vsyncadd [#allocation4], %s74
      %s77 = sshll.u32 [#allocation8], 4
      %s78 = int_to_ptr.vmem [resolvable:$true] %s77
      %80 = dma.vmem_to_hbm [thread:$0]  %s78, 128, %s3, [#allocation4]
    $region29: #{tpu_custom_call.1} parent=1 // pred_fallthru
      _
    // Predicated region
    $region30: #{tpu_custom_call.1} parent=1 // pred_check
      _
    $region31: #{tpu_custom_call.1} parent=1 // pred_check_branch
      %82 = sbr.rel (0) target = $region33
    $region32: #{tpu_custom_call.1} parent=1 // pred_region
      %83 = dma.done [#allocation4], 128
    $region33: #{tpu_custom_call.1} parent=1 // pred_fallthru
      _
    %84 = vsyncpa [#allocation3], 1
    %85 = vsyncpa [#allocation6], 1
    %86 = vsyncpa [#allocation4], 1

</llo_original>
